<compile_context>
chip_gen: v5e
topology: v5e:2x2
jax: 0.10.0
libtpu: 0.0.40
codegen_flags: <defaults>
</compile_context>

<pallas_src>
import functools
import math

import jax
import jax.numpy as jnp
from jax.experimental import pallas as pl
from jax.experimental.pallas import tpu as pltpu

H1, H2 = 400, 300          # logical hidden sizes (PyTorch module)
H1_PAD, H2_PAD = 512, 384  # lane-padded hidden sizes
LANE = 128


def _round_up(x, m):
    return ((x + m - 1) // m) * m


def _default_bf16_epilogue():
    """bf16 bias/ReLU epilogue only on chips with a native bf16 VPU."""
    try:
        kind = jax.devices()[0].device_kind.lower()
    except Exception:
        return False
    return ("v6" in kind) or ("v7" in kind)


# ---------------------------------------------------------------------------
# Kernel: one batch tile through the whole 3-layer MLP.
# Weights are bf16 (MXU-native); accumulation is f32; hidden epilogues run in
# `act_dtype` (bf16 on v6e/v7x, f32 on v5e); final tanh epilogue stays f32.
# ---------------------------------------------------------------------------
def _actor_kernel(x_ref, w1_ref, b1_ref, w2_ref, b2_ref, w3_ref, b3_ref, o_ref,
                  *, act_dtype):
    # Layer 1: Linear(n_states, 400) + ReLU.
    h1 = jnp.dot(x_ref[...], w1_ref[...], preferred_element_type=jnp.float32)
    h1 = h1.astype(act_dtype) + b1_ref[...].astype(act_dtype)
    h1 = jnp.maximum(h1, 0).astype(jnp.bfloat16)

    # Layer 2: Linear(400, 300) + ReLU.
    h2 = jnp.dot(h1, w2_ref[...], preferred_element_type=jnp.float32)
    h2 = h2.astype(act_dtype) + b2_ref[...].astype(act_dtype)
    h2 = jnp.maximum(h2, 0).astype(jnp.bfloat16)

    # Final layer: Linear(300, n_actions) + Tanh (f32 epilogue; the EUP tanh on
    # a [tile_b, 128] slab is cheap and sits in its own bundle slot).
    h3 = jnp.dot(h2, w3_ref[...], preferred_element_type=jnp.float32)
    o_ref[...] = jnp.tanh(h3 + b3_ref[...]).astype(o_ref.dtype)


# ---------------------------------------------------------------------------
# Parameter preparation: pad to lane multiples, cast matmul operands to bf16.
# ---------------------------------------------------------------------------
def prepare_actor_params(w1, b1, w2, b2, w3, b3):
    """Zero-pad feature dims to 128-multiples; weights -> bf16, biases -> f32."""
    n_states = w1.shape[0]
    n_actions = w3.shape[1]
    s_pad = _round_up(n_states, LANE)
    a_pad = _round_up(n_actions, LANE)

    def pad2(a, rows, cols):
        return jnp.pad(a, ((0, rows - a.shape[0]), (0, cols - a.shape[1])))

    w1p = pad2(w1, s_pad, H1_PAD).astype(jnp.bfloat16)
    w2p = pad2(w2, H1_PAD, H2_PAD).astype(jnp.bfloat16)
    w3p = pad2(w3, H2_PAD, a_pad).astype(jnp.bfloat16)
    b1p = pad2(b1, 1, H1_PAD).astype(jnp.float32)
    b2p = pad2(b2, 1, H2_PAD).astype(jnp.float32)
    b3p = pad2(b3, 1, a_pad).astype(jnp.float32)
    return (w1p, b1p, w2p, b2p, w3p, b3p)


# ---------------------------------------------------------------------------
# Batch tiling: big 256-aligned tiles for training batches (amortize grid-step
# overhead, fill the 256-wide MXU, >= 2 steps for v7x's two TensorCores);
# a single 16-row-aligned tile for tiny inference batches (bf16 row packing).
# ---------------------------------------------------------------------------
def _choose_batch_tiling(batch, tile_b):
    b16 = _round_up(batch, 16)          # bf16 packs two rows per sublane
    if b16 <= 256:
        return b16, b16                 # one small tile; weight-DMA bound anyway
    half = _round_up(-(-b16 // 2), 256)  # ceil(b16/2) rounded to MXU width
    tile = min(_round_up(tile_b, 256), half)
    b_pad = _round_up(b16, tile)
    return tile, b_pad


# ---------------------------------------------------------------------------
# Wrapper: batch-tiled, weight-stationary pallas_call.
# ---------------------------------------------------------------------------
@functools.partial(jax.jit, static_argnames=("n_actions", "tile_b", "bf16_epilogue"))
def actor_forward(x, padded_params, *, n_actions, tile_b=1024, bf16_epilogue=False):
    w1p, b1p, w2p, b2p, w3p, b3p = padded_params
    batch, n_states = x.shape
    s_pad = w1p.shape[0]
    a_pad = w3p.shape[1]

    tile, b_pad = _choose_batch_tiling(batch, tile_b)
    grid = (b_pad // tile,)

    # Single fused pad of the bf16 cast (no zeros + dynamic-update-slice).
    xp = jnp.pad(x.astype(jnp.bfloat16),
                 ((0, b_pad - batch), (0, s_pad - n_states)))

    const = lambda i: (0, 0)  # weights / biases: same block every step (resident)

    flops = 2 * b_pad * (s_pad * H1_PAD + H1_PAD * H2_PAD + H2_PAD * a_pad)
    bytes_accessed = (
        xp.size * 2
        + (w1p.size + w2p.size + w3p.size) * 2
        + (b1p.size + b2p.size + b3p.size) * 4
        + b_pad * a_pad * 4
    )

    act_dtype = jnp.bfloat16 if bf16_epilogue else jnp.float32

    out_padded = pl.pallas_call(
        functools.partial(_actor_kernel, act_dtype=act_dtype),
        out_shape=jax.ShapeDtypeStruct((b_pad, a_pad), jnp.float32),
        grid=grid,
        in_specs=[
            pl.BlockSpec((tile, s_pad), lambda i: (i, 0)),   # x: tiled on batch
            pl.BlockSpec((s_pad, H1_PAD), const),            # w1 (resident)
            pl.BlockSpec((1, H1_PAD), const),                # b1
            pl.BlockSpec((H1_PAD, H2_PAD), const),           # w2
            pl.BlockSpec((1, H2_PAD), const),                # b2
            pl.BlockSpec((H2_PAD, a_pad), const),            # w3
            pl.BlockSpec((1, a_pad), const),                 # b3
        ],
        out_specs=pl.BlockSpec((tile, a_pad), lambda i: (i, 0)),
        compiler_params=pltpu.CompilerParams(
            dimension_semantics=("parallel",),               # v7x: shard across TCs
        ),
        cost_estimate=pl.CostEstimate(
            flops=flops,
            transcendentals=b_pad * a_pad,
            bytes_accessed=bytes_accessed,
        ),
    )(xp, w1p, b1p, w2p, b2p, w3p, b3p)

    return out_padded[:batch, :n_actions]


# ---------------------------------------------------------------------------
# Init matching the PyTorch module's custom init scheme (weights stored
# transposed: [in_features, out_features]).
# ---------------------------------------------------------------------------
def init_actor_params(key, n_states, n_actions):
    ks = jax.random.split(key, 6)

    def uniform(k, shape, bound):
        return jax.random.uniform(k, shape, jnp.float32, -bound, bound)

    # Hidden layers: weight ~ U(-1/sqrt(out_features), 1/sqrt(out_features))
    # (PyTorch code uses weight.size()[0] == out_features); bias keeps the
    # nn.Linear default U(+-1/sqrt(fan_in)).
    w1 = uniform(ks[0], (n_states, H1), 1.0 / math.sqrt(float(H1)))
    b1 = uniform(ks[1], (1, H1), 1.0 / math.sqrt(float(n_states)))
    w2 = uniform(ks[2], (H1, H2), 1.0 / math.sqrt(float(H2)))
    b2 = uniform(ks[3], (1, H2), 1.0 / math.sqrt(float(H1)))
    # Final layer: weight ~ U(-0.003, 0.003); bias keeps default U(+-1/sqrt(fan_in)).
    w3 = uniform(ks[4], (H2, n_actions), 0.003)
    b3 = uniform(ks[5], (1, n_actions), 1.0 / math.sqrt(float(H2)))
    return w1, b1, w2, b2, w3, b3


def actor_reference(x, w1, b1, w2, b2, w3, b3):
    h1 = jnp.maximum(x @ w1 + b1, 0.0)
    h2 = jnp.maximum(h1 @ w2 + b2, 0.0)
    return jnp.tanh(h2 @ w3 + b3)


if __name__ == "__main__":
    key = jax.random.PRNGKey(0)
    k_x, k_p = jax.random.split(key)

    batch, n_states, n_actions = 8, 16, 8
    x = jax.random.normal(k_x, (batch, n_states), dtype=jnp.float32)
    params = init_actor_params(k_p, n_states, n_actions)

    padded_params = prepare_actor_params(*params)
    bf16_ep = _default_bf16_epilogue()
    out = actor_forward(x, padded_params, n_actions=n_actions,
                        bf16_epilogue=bf16_ep)
    out = jax.block_until_ready(out)

    ref = actor_reference(x, *params)
    assert out.shape == (batch, n_actions)
    # bf16 MXU operands (f32 accumulation) -> loosened tolerance vs f32 reference.
    assert jnp.allclose(out, ref, atol=2e-2, rtol=2e-2), "mismatch vs reference"

    print("KERNEL_OK")
</pallas_src>

<mosaic_0001>
module attributes {stable_mosaic.version = 11 : i64} {
  func.func @_actor_kernel(%arg0: i32, %arg1: memref<16x128xbf16, #tpu.memory_space<vmem>>, %arg2: memref<128x512xbf16, #tpu.memory_space<vmem>>, %arg3: memref<1x512xf32, #tpu.memory_space<vmem>>, %arg4: memref<512x384xbf16, #tpu.memory_space<vmem>>, %arg5: memref<1x384xf32, #tpu.memory_space<vmem>>, %arg6: memref<384x128xbf16, #tpu.memory_space<vmem>>, %arg7: memref<1x128xf32, #tpu.memory_space<vmem>>, %arg8: memref<16x128xf32, #tpu.memory_space<vmem>>) attributes {dimension_semantics = [#tpu.dimension_semantics<parallel>], iteration_bounds = array<i64: 1>, scalar_prefetch = 0 : i64, scratch_operands = 0 : i64, tpu.core_type = #tpu.core_type<tc>, window_params = [{transform_indices = @transform_0, window_bounds = array<i64: 16, 128>}, {pipeline_mode = #tpu.pipeline_mode<synchronous>, transform_indices = @transform_1, window_bounds = array<i64: 128, 512>}, {pipeline_mode = #tpu.pipeline_mode<synchronous>, transform_indices = @transform_2, window_bounds = array<i64: 1, 512>}, {pipeline_mode = #tpu.pipeline_mode<synchronous>, transform_indices = @transform_3, window_bounds = array<i64: 512, 384>}, {pipeline_mode = #tpu.pipeline_mode<synchronous>, transform_indices = @transform_4, window_bounds = array<i64: 1, 384>}, {pipeline_mode = #tpu.pipeline_mode<synchronous>, transform_indices = @transform_5, window_bounds = array<i64: 384, 128>}, {pipeline_mode = #tpu.pipeline_mode<synchronous>, transform_indices = @transform_6, window_bounds = array<i64: 1, 128>}, {transform_indices = @transform_7, window_bounds = array<i64: 16, 128>}]} {
    %c0 = arith.constant 0 : index
    %c0_0 = arith.constant 0 : index
    %0 = vector.load %arg1[%c0, %c0_0] : memref<16x128xbf16, #tpu.memory_space<vmem>>, vector<16x128xbf16>
    %c0_1 = arith.constant 0 : index
    %c0_2 = arith.constant 0 : index
    %1 = vector.load %arg2[%c0_1, %c0_2] : memref<128x512xbf16, #tpu.memory_space<vmem>>, vector<128x512xbf16>
    %cst = arith.constant dense<0.000000e+00> : vector<16x512xf32>
    %2 = tpu.matmul %0, %1, %cst {dimension_numbers = #tpu.dot_dimension_numbers<[1], [0], [0], [1], [0, 0, 1, 1], [], []>} : vector<16x128xbf16>, vector<128x512xbf16>, vector<16x512xf32> -> vector<16x512xf32>
    %c0_3 = arith.constant 0 : index
    %c0_4 = arith.constant 0 : index
    %3 = vector.load %arg3[%c0_3, %c0_4] : memref<1x512xf32, #tpu.memory_space<vmem>>, vector<1x512xf32>
    %4 = vector.broadcast %3 : vector<1x512xf32> to vector<16x512xf32>
    %5 = arith.addf %2, %4 : vector<16x512xf32>
    %cst_5 = arith.constant 0.000000e+00 : f32
    %6 = vector.broadcast %cst_5 : f32 to vector<16x512xf32>
    %7 = arith.maximumf %5, %6 : vector<16x512xf32>
    %8 = arith.truncf %7 : vector<16x512xf32> to vector<16x512xbf16>
    %c0_6 = arith.constant 0 : index
    %c0_7 = arith.constant 0 : index
    %9 = vector.load %arg4[%c0_6, %c0_7] : memref<512x384xbf16, #tpu.memory_space<vmem>>, vector<512x384xbf16>
    %cst_8 = arith.constant dense<0.000000e+00> : vector<16x384xf32>
    %10 = tpu.matmul %8, %9, %cst_8 {dimension_numbers = #tpu.dot_dimension_numbers<[1], [0], [0], [1], [0, 0, 1, 1], [], []>} : vector<16x512xbf16>, vector<512x384xbf16>, vector<16x384xf32> -> vector<16x384xf32>
    %c0_9 = arith.constant 0 : index
    %c0_10 = arith.constant 0 : index
    %11 = vector.load %arg5[%c0_9, %c0_10] : memref<1x384xf32, #tpu.memory_space<vmem>>, vector<1x384xf32>
    %12 = vector.broadcast %11 : vector<1x384xf32> to vector<16x384xf32>
    %13 = arith.addf %10, %12 : vector<16x384xf32>
    %cst_11 = arith.constant 0.000000e+00 : f32
    %14 = vector.broadcast %cst_11 : f32 to vector<16x384xf32>
    %15 = arith.maximumf %13, %14 : vector<16x384xf32>
    %16 = arith.truncf %15 : vector<16x384xf32> to vector<16x384xbf16>
    %c0_12 = arith.constant 0 : index
    %c0_13 = arith.constant 0 : index
    %17 = vector.load %arg6[%c0_12, %c0_13] : memref<384x128xbf16, #tpu.memory_space<vmem>>, vector<384x128xbf16>
    %cst_14 = arith.constant dense<0.000000e+00> : vector<16x128xf32>
    %18 = tpu.matmul %16, %17, %cst_14 {dimension_numbers = #tpu.dot_dimension_numbers<[1], [0], [0], [1], [0, 0, 1, 1], [], []>} : vector<16x384xbf16>, vector<384x128xbf16>, vector<16x128xf32> -> vector<16x128xf32>
    %c0_15 = arith.constant 0 : index
    %c0_16 = arith.constant 0 : index
    %19 = vector.load %arg7[%c0_15, %c0_16] : memref<1x128xf32, #tpu.memory_space<vmem>>, vector<1x128xf32>
    %20 = vector.broadcast %19 : vector<1x128xf32> to vector<16x128xf32>
    %21 = arith.addf %18, %20 : vector<16x128xf32>
    %22 = math.tanh %21 : vector<16x128xf32>
    %c0_17 = arith.constant 0 : index
    %c0_18 = arith.constant 0 : index
    %23 = vector.load %arg8[%c0_17, %c0_18] : memref<16x128xf32, #tpu.memory_space<vmem>>, vector<16x128xf32>
    tpu.vector_store %arg8[%c0_17, %c0_18], %22 {strides = array<i32>} : memref<16x128xf32, #tpu.memory_space<vmem>>, vector<16x128xf32>,
    return
  }
  func.func @transform_0(%arg0: i32) -> (i32, i32) {
    %c0_i32 = arith.constant 0 : i32
    %c0_i32_0 = arith.constant 0 : i32
    return %arg0, %c0_i32 : i32, i32
  }
  func.func @transform_1(%arg0: i32) -> (i32, i32) {
    %c0_i32 = arith.constant 0 : i32
    %c0_i32_0 = arith.constant 0 : i32
    %c0_i32_1 = arith.constant 0 : i32
    return %c0_i32, %c0_i32_0 : i32, i32
  }
  func.func @transform_2(%arg0: i32) -> (i32, i32) {
    %c0_i32 = arith.constant 0 : i32
    %c0_i32_0 = arith.constant 0 : i32
    %c0_i32_1 = arith.constant 0 : i32
    return %c0_i32, %c0_i32_0 : i32, i32
  }
  func.func @transform_3(%arg0: i32) -> (i32, i32) {
    %c0_i32 = arith.constant 0 : i32
    %c0_i32_0 = arith.constant 0 : i32
    %c0_i32_1 = arith.constant 0 : i32
    return %c0_i32, %c0_i32_0 : i32, i32
  }
  func.func @transform_4(%arg0: i32) -> (i32, i32) {
    %c0_i32 = arith.constant 0 : i32
    %c0_i32_0 = arith.constant 0 : i32
    %c0_i32_1 = arith.constant 0 : i32
    return %c0_i32, %c0_i32_0 : i32, i32
  }
  func.func @transform_5(%arg0: i32) -> (i32, i32) {
    %c0_i32 = arith.constant 0 : i32
    %c0_i32_0 = arith.constant 0 : i32
    %c0_i32_1 = arith.constant 0 : i32
    return %c0_i32, %c0_i32_0 : i32, i32
  }
  func.func @transform_6(%arg0: i32) -> (i32, i32) {
    %c0_i32 = arith.constant 0 : i32
    %c0_i32_0 = arith.constant 0 : i32
    %c0_i32_1 = arith.constant 0 : i32
    return %c0_i32, %c0_i32_0 : i32, i32
  }
  func.func @transform_7(%arg0: i32) -> (i32, i32) {
    %c0_i32 = arith.constant 0 : i32
    %c0_i32_0 = arith.constant 0 : i32
    return %arg0, %c0_i32 : i32, i32
  }
}

</mosaic_0001>

<llo_original>
// kernel: actor_forward.1
$region0: #{actor_forward.1}
  #allocation0 [shape = 'u32[]', space=smem, size = 0x4, offset = 0x4, fixed_abs, tag = 'smem constant byte address 0x4 - core index']
  #allocation1 [shape = 'u32[72,128]{1,0:T(1,128)}', space=vmem, size = 0x9000, scoped, tag = 'internal scratch']
  %s0 = inlined_call_operand.vmem [shape: bf16[16,128], index: 0, kind: input, shape index: {}]
  %s1 = inlined_call_operand.hbm [shape: bf16[128,512], index: 1, kind: input, shape index: {}]
  %s2 = inlined_call_operand.vmem [shape: f32[1,512], index: 2, kind: input, shape index: {}]
  %s3 = inlined_call_operand.hbm [shape: bf16[512,384], index: 3, kind: input, shape index: {}]
  %s4 = inlined_call_operand.vmem [shape: f32[1,384], index: 4, kind: input, shape index: {}]
  %s5 = inlined_call_operand.hbm [shape: bf16[384,128], index: 5, kind: input, shape index: {}]
  %s6 = inlined_call_operand.vmem [shape: f32[1,128], index: 6, kind: input, shape index: {}]
  %s7 = inlined_call_operand.vmem [shape: f32[16,128], index: 7, kind: output, shape index: {}]
  %s8 = sld [smem:[#allocation0]]
  $region50: #{actor_forward.1} parent=0
    _
  %s10 = ssub.s32 1, %s8
  %s11 = scalar_select 0, %s10, %s8
  $region1: #{actor_forward.1} parent=0
    #allocation2 [shape = 'u8[131072]{0}', space=vmem, size = 0x20000, scoped, tag = 'input window, operand 1, single buffered']
    #allocation3 [shape = 's32[1]{0}', space=sflag, size = 0x4, scoped, tag = 'scoped memory for actor_forward.1']
    #allocation4 [shape = 'u8[393216]{0}', space=vmem, size = 0x60000, scoped, tag = 'input window, operand 3, single buffered']
    #allocation5 [shape = 's32[1]{0}', space=sflag, size = 0x4, scoped, tag = 'scoped memory for actor_forward.1']
    #allocation6 [shape = 'u8[98304]{0}', space=vmem, size = 0x18000, scoped, tag = 'input window, operand 5, single buffered']
    %12 = vsyncpa [#allocation3], 0
    %13 = vsyncpa [#allocation5], 0
    // Predicated region
    $region2: #{actor_forward.1} parent=1 // pred_check
      _
    $region3: #{actor_forward.1} parent=1 // pred_check_branch
      %15 = sbr.rel (0) target = $region5
    $region4: #{actor_forward.1} parent=1 // pred_region
      _
    $region5: #{actor_forward.1} parent=1 // pred_fallthru
      _
    // Predicated region
    $region6: #{actor_forward.1} parent=1 // pred_check
      _
    $region7: #{actor_forward.1} parent=1 // pred_check_branch
      %17 = sbr.rel (0) target = $region9
    $region8: #{actor_forward.1} parent=1 // pred_region
      %19 = vsyncadd [#allocation3], 0
      %s20 = sshll.u32 %s1, 4
      %s21 = int_to_ptr.hbm [resolvable:$true] %s20
      %s22 = sshll.u32 [#allocation2], 4
      %s23 = int_to_ptr.vmem [resolvable:$true] %s22
      %28 = dma.hbm_to_vmem [thread:$0]  %s21, 4096, %s23, [#allocation3], 256, 256, 16
    $region9: #{actor_forward.1} parent=1 // pred_fallthru
      _
    // Predicated region
    $region10: #{actor_forward.1} parent=1 // pred_check
      _
    $region11: #{actor_forward.1} parent=1 // pred_check_branch
      %30 = sbr.rel (0) target = $region13
    $region12: #{actor_forward.1} parent=1 // pred_region
      _
    $region13: #{actor_forward.1} parent=1 // pred_fallthru
      _
    // Predicated region
    $region14: #{actor_forward.1} parent=1 // pred_check
      _
    $region15: #{actor_forward.1} parent=1 // pred_check_branch
      %32 = sbr.rel (0) target = $region17
    $region16: #{actor_forward.1} parent=1 // pred_region
      %34 = vsyncadd [#allocation5], 0
      %s35 = sshll.u32 %s3, 4
      %s36 = int_to_ptr.hbm [resolvable:$true] %s35
      %s37 = sshll.u32 [#allocation4], 4
      %s38 = int_to_ptr.vmem [resolvable:$true] %s37
      %43 = dma.hbm_to_vmem [thread:$0]  %s36, 12288, %s38, [#allocation5], 192, 192, 12
    $region17: #{actor_forward.1} parent=1 // pred_fallthru
      _
    // Predicated region
    $region18: #{actor_forward.1} parent=1 // pred_check
      _
    $region19: #{actor_forward.1} parent=1 // pred_check_branch
      %45 = sbr.rel (0) target = $region21
    $region20: #{actor_forward.1} parent=1 // pred_region
      _
    $region21: #{actor_forward.1} parent=1 // pred_fallthru
      _
    // Predicated region
    $region22: #{actor_forward.1} parent=1 // pred_check
      _
    $region23: #{actor_forward.1} parent=1 // pred_check_branch
      %47 = sbr.rel (0) target = $region25
    $region24: #{actor_forward.1} parent=1 // pred_region
      %49 = vsyncadd [#allocation5], 0
      %s50 = sshll.u32 %s5, 4
      %s51 = int_to_ptr.hbm [resolvable:$true] %s50
      %s52 = sshll.u32 [#allocation6], 4
      %s53 = int_to_ptr.vmem [resolvable:$true] %s52
      %58 = dma.hbm_to_vmem [thread:$0]  %s51, 3072, %s53, [#allocation5], 64, 64, 4
    $region25: #{actor_forward.1} parent=1 // pred_fallthru
      _
    // Predicated region
    $region26: #{actor_forward.1} parent=1 // pred_check
      _
    $region27: #{actor_forward.1} parent=1 // pred_check_branch
      %60 = sbr.rel (0) target = $region29
    $region28: #{actor_forward.1} parent=1 // pred_region
      _
    $region29: #{actor_forward.1} parent=1 // pred_fallthru
      _
    // Predicated region
    $region30: #{actor_forward.1} parent=1 // pred_check
      _
    $region31: #{actor_forward.1} parent=1 // pred_check_branch
      %62 = sbr.rel (0) target = $region33
    $region32: #{actor_forward.1} parent=1 // pred_region
      %64 = dma.done [#allocation3], 4096
    $region33: #{actor_forward.1} parent=1 // pred_fallthru
      _
    // Predicated region
    $region34: #{actor_forward.1} parent=1 // pred_check
      _
    $region35: #{actor_forward.1} parent=1 // pred_check_branch
      %66 = sbr.rel (0) target = $region37
    $region36: #{actor_forward.1} parent=1 // pred_region
      %68 = dma.done [#allocation5], 12288
    $region37: #{actor_forward.1} parent=1 // pred_fallthru
      _
    // Predicated region
    $region38: #{actor_forward.1} parent=1 // pred_check
      _
    $region39: #{actor_forward.1} parent=1 // pred_check_branch
      %70 = sbr.rel (0) target = $region41
    $region40: #{actor_forward.1} parent=1 // pred_region
      %72 = dma.done [#allocation5], 3072
    $region41: #{actor_forward.1} parent=1 // pred_fallthru
      _
    %v73 = vld [vmem:[%s0] sm:$0xf]
    %v74 = vld [vmem:[%s0 + $0x4] sm:$0xf]
    %v75 = vld [vmem:[#allocation2] sm:$0xff]
    %v76 = vld [vmem:[#allocation2 + $0x8] sm:$0xff]
    %v77 = vld [vmem:[#allocation2 + $0x10] sm:$0xff]
    %v78 = vld [vmem:[#allocation2 + $0x18] sm:$0xff]
    %v79 = vld [vmem:[#allocation2 + $0x20] sm:$0xff]
    %v80 = vld [vmem:[#allocation2 + $0x28] sm:$0xff]
    %v81 = vld [vmem:[#allocation2 + $0x30] sm:$0xff]
    %v82 = vld [vmem:[#allocation2 + $0x38] sm:$0xff]
    %v83 = vld [vmem:[#allocation2 + $0x40] sm:$0xff]
    %v84 = vld [vmem:[#allocation2 + $0x48] sm:$0xff]
    %v85 = vld [vmem:[#allocation2 + $0x50] sm:$0xff]
    %v86 = vld [vmem:[#allocation2 + $0x58] sm:$0xff]
    %v87 = vld [vmem:[#allocation2 + $0x60] sm:$0xff]
    %v88 = vld [vmem:[#allocation2 + $0x68] sm:$0xff]
    %v89 = vld [vmem:[#allocation2 + $0x70] sm:$0xff]
    %v90 = vld [vmem:[#allocation2 + $0x78] sm:$0xff]
    %v91 = vld [vmem:[#allocation2 + $0x80] sm:$0xff]
    %v92 = vld [vmem:[#allocation2 + $0x88] sm:$0xff]
    %v93 = vld [vmem:[#allocation2 + $0x90] sm:$0xff]
    %v94 = vld [vmem:[#allocation2 + $0x98] sm:$0xff]
    %v95 = vld [vmem:[#allocation2 + $0xa0] sm:$0xff]
    %v96 = vld [vmem:[#allocation2 + $0xa8] sm:$0xff]
    %v97 = vld [vmem:[#allocation2 + $0xb0] sm:$0xff]
    %v98 = vld [vmem:[#allocation2 + $0xb8] sm:$0xff]
    %v99 = vld [vmem:[#allocation2 + $0xc0] sm:$0xff]
    %v100 = vld [vmem:[#allocation2 + $0xc8] sm:$0xff]
    %v101 = vld [vmem:[#allocation2 + $0xd0] sm:$0xff]
    %v102 = vld [vmem:[#allocation2 + $0xd8] sm:$0xff]
    %v103 = vld [vmem:[#allocation2 + $0xe0] sm:$0xff]
    %v104 = vld [vmem:[#allocation2 + $0xe8] sm:$0xff]
    %v105 = vld [vmem:[#allocation2 + $0xf0] sm:$0xff]
    %v106 = vld [vmem:[#allocation2 + $0xf8] sm:$0xff]
    %v107 = vld [vmem:[%s2] sm:$0xf]
    %v109 = vperm.slane %v107, 0
    %v110 = vperm.slane %v107, 1
    %v111 = vperm.slane %v107, 2
    %v112 = vperm.slane %v107, 3
    %v119 = vunpack.c.l.b16 %v73
    %v120 = vunpack.c.l.b16 %v74
    %v121 = vpack.c.b16 %v120, %v119
    %v155 = vunpack.c.l.b16 %v75
    %v156 = vunpack.c.h.b16 %v75
    %v157 = vunpack.c.l.b16 %v76
    %v158 = vunpack.c.h.b16 %v76
    %v159 = vunpack.c.l.b16 %v77
    %v160 = vunpack.c.h.b16 %v77
    %v161 = vunpack.c.l.b16 %v78
    %v162 = vunpack.c.h.b16 %v78
    %v163 = vunpack.c.l.b16 %v79
    %v164 = vunpack.c.h.b16 %v79
    %v165 = vunpack.c.l.b16 %v80
    %v166 = vunpack.c.h.b16 %v80
    %v167 = vunpack.c.l.b16 %v81
    %v168 = vunpack.c.h.b16 %v81
    %v169 = vunpack.c.l.b16 %v82
    %v170 = vunpack.c.h.b16 %v82
    %v171 = vunpack.c.l.b16 %v83
    %v172 = vunpack.c.h.b16 %v83
    %v173 = vunpack.c.l.b16 %v84
    %v174 = vunpack.c.h.b16 %v84
    %v175 = vunpack.c.l.b16 %v85
    %v176 = vunpack.c.h.b16 %v85
    %v177 = vunpack.c.l.b16 %v86
    %v178 = vunpack.c.h.b16 %v86
    %v179 = vunpack.c.l.b16 %v87
    %v180 = vunpack.c.h.b16 %v87
    %v181 = vunpack.c.l.b16 %v88
    %v182 = vunpack.c.h.b16 %v88
    %v183 = vunpack.c.l.b16 %v89
    %v184 = vunpack.c.h.b16 %v89
    %v185 = vunpack.c.l.b16 %v90
    %v186 = vunpack.c.h.b16 %v90
    %v187 = vunpack.c.l.b16 %v91
    %v188 = vunpack.c.h.b16 %v91
    %v189 = vunpack.c.l.b16 %v92
    %v190 = vunpack.c.h.b16 %v92
    %v191 = vunpack.c.l.b16 %v93
    %v192 = vunpack.c.h.b16 %v93
    %v193 = vunpack.c.l.b16 %v94
    %v194 = vunpack.c.h.b16 %v94
    %v195 = vunpack.c.l.b16 %v95
    %v196 = vunpack.c.h.b16 %v95
    %v197 = vunpack.c.l.b16 %v96
    %v198 = vunpack.c.h.b16 %v96
    %v199 = vunpack.c.l.b16 %v97
    %v200 = vunpack.c.h.b16 %v97
    %v201 = vunpack.c.l.b16 %v98
    %v202 = vunpack.c.h.b16 %v98
    %v203 = vunpack.c.l.b16 %v99
    %v204 = vunpack.c.h.b16 %v99
    %v205 = vunpack.c.l.b16 %v100
    %v206 = vunpack.c.h.b16 %v100
    %v207 = vunpack.c.l.b16 %v101
    %v208 = vunpack.c.h.b16 %v101
    %v209 = vunpack.c.l.b16 %v102
    %v210 = vunpack.c.h.b16 %v102
    %v211 = vunpack.c.l.b16 %v103
    %v212 = vunpack.c.h.b16 %v103
    %v213 = vunpack.c.l.b16 %v104
    %v214 = vunpack.c.h.b16 %v104
    %v215 = vunpack.c.l.b16 %v105
    %v216 = vunpack.c.h.b16 %v105
    %v217 = vunpack.c.l.b16 %v106
    %v218 = vunpack.c.h.b16 %v106
    %v219 = vpack.c.b16 %v159, %v155
    %v220 = vpack.c.b16 %v160, %v156
    %v221 = vpack.c.b16 %v161, %v157
    %v222 = vpack.c.b16 %v162, %v158
    %v223 = vpack.c.b16 %v167, %v163
    %v224 = vpack.c.b16 %v168, %v164
    %v225 = vpack.c.b16 %v169, %v165
    %v226 = vpack.c.b16 %v170, %v166
    %v227 = vpack.c.b16 %v175, %v171
    %v228 = vpack.c.b16 %v176, %v172
    %v229 = vpack.c.b16 %v177, %v173
    %v230 = vpack.c.b16 %v178, %v174
    %v231 = vpack.c.b16 %v183, %v179
    %v232 = vpack.c.b16 %v184, %v180
    %v233 = vpack.c.b16 %v185, %v181
    %v234 = vpack.c.b16 %v186, %v182
    %v235 = vpack.c.b16 %v191, %v187
    %v236 = vpack.c.b16 %v192, %v188
    %v237 = vpack.c.b16 %v193, %v189
    %v238 = vpack.c.b16 %v194, %v190
    %v239 = vpack.c.b16 %v199, %v195
    %v240 = vpack.c.b16 %v200, %v196
    %v241 = vpack.c.b16 %v201, %v197
    %v242 = vpack.c.b16 %v202, %v198
    %v243 = vpack.c.b16 %v207, %v203
    %v244 = vpack.c.b16 %v208, %v204
    %v245 = vpack.c.b16 %v209, %v205
    %v246 = vpack.c.b16 %v210, %v206
    %v247 = vpack.c.b16 %v215, %v211
    %v248 = vpack.c.b16 %v216, %v212
    %v249 = vpack.c.b16 %v217, %v213
    %v250 = vpack.c.b16 %v218, %v214
    %283 = vmatpush.bf16.msra.mxu0 %v247
    %284 = vmatpush.bf16.msra.mxu0 %v243
    %285 = vmatpush.bf16.msra.mxu0 %v239
    %286 = vmatpush.bf16.msra.mxu0 %v235
    %287 = vmatpush.bf16.msra.mxu0 %v231
    %288 = vmatpush.bf16.msra.mxu0 %v227
    %289 = vmatpush.bf16.msra.mxu0 %v223
    %290 = vmatpush.bf16.msra.mxu0 %v219
    %291 = vmatmul.bf16.gmra.mxu0 %v121
    %v292 = vpop.f32.mrf.mxu0
    %v293 = vadd.f32 %v109, %v292
    %v294 = vpop.f32.mrf.mxu0
    %v295 = vadd.f32 %v109, %v294
    %296 = vdwg.mxu0
    %297 = vmatpush.bf16.msra.mxu0 %v248
    %298 = vmatpush.bf16.msra.mxu0 %v244
    %299 = vmatpush.bf16.msra.mxu0 %v240
    %300 = vmatpush.bf16.msra.mxu0 %v236
    %301 = vmatpush.bf16.msra.mxu0 %v232
    %302 = vmatpush.bf16.msra.mxu0 %v228
    %303 = vmatpush.bf16.msra.mxu0 %v224
    %304 = vmatpush.bf16.msra.mxu0 %v220
    %305 = vmatmul.bf16.gmra.mxu0 %v121
    %v306 = vpop.f32.mrf.mxu0
    %v307 = vadd.f32 %v110, %v306
    %v308 = vpop.f32.mrf.mxu0
    %v309 = vadd.f32 %v110, %v308
    %310 = vdwg.mxu0
    %311 = vmatpush.bf16.msra.mxu0 %v249
    %312 = vmatpush.bf16.msra.mxu0 %v245
    %313 = vmatpush.bf16.msra.mxu0 %v241
    %314 = vmatpush.bf16.msra.mxu0 %v237
    %315 = vmatpush.bf16.msra.mxu0 %v233
    %316 = vmatpush.bf16.msra.mxu0 %v229
    %317 = vmatpush.bf16.msra.mxu0 %v225
    %318 = vmatpush.bf16.msra.mxu0 %v221
    %319 = vmatmul.bf16.gmra.mxu0 %v121
    %v320 = vpop.f32.mrf.mxu0
    %v321 = vadd.f32 %v111, %v320
    %v322 = vpop.f32.mrf.mxu0
    %v323 = vadd.f32 %v111, %v322
    %324 = vdwg.mxu0
    %325 = vmatpush.bf16.msra.mxu0 %v250
    %326 = vmatpush.bf16.msra.mxu0 %v246
    %327 = vmatpush.bf16.msra.mxu0 %v242
    %328 = vmatpush.bf16.msra.mxu0 %v238
    %329 = vmatpush.bf16.msra.mxu0 %v234
    %330 = vmatpush.bf16.msra.mxu0 %v230
    %331 = vmatpush.bf16.msra.mxu0 %v226
    %332 = vmatpush.bf16.msra.mxu0 %v222
    %333 = vmatmul.bf16.gmra.mxu0 %v121
    %v334 = vpop.f32.mrf.mxu0
    %v335 = vadd.f32 %v112, %v334
    %v336 = vpop.f32.mrf.mxu0
    %v337 = vadd.f32 %v112, %v336
    %338 = vdwg.mxu0
    %v339 = vmax.f32 %v293, 0.0
    %v340 = vmax.f32 %v307, 0.0
    %v341 = vmax.f32 %v321, 0.0
    %v342 = vmax.f32 %v335, 0.0
    %v343 = vmax.f32 %v295, 0.0
    %v344 = vmax.f32 %v309, 0.0
    %v345 = vmax.f32 %v323, 0.0
    %v346 = vmax.f32 %v337, 0.0
    %v347 = vpack.c.bf16 %v343, %v339
    %v348 = vpack.c.bf16 %v344, %v340
    %v349 = vpack.c.bf16 %v345, %v341
    %v350 = vpack.c.bf16 %v346, %v342
    %v351 = vld [vmem:[#allocation4] sm:$0xff]
    %v352 = vld [vmem:[#allocation4 + $0x8] sm:$0xf]
    %v353 = vld [vmem:[#allocation4 + $0xc] sm:$0xff]
    %v354 = vld [vmem:[#allocation4 + $0x14] sm:$0xf]
    %v355 = vld [vmem:[#allocation4 + $0x18] sm:$0xff]
    %v356 = vld [vmem:[#allocation4 + $0x20] sm:$0xf]
    %v357 = vld [vmem:[#allocation4 + $0x24] sm:$0xff]
    %v358 = vld [vmem:[#allocation4 + $0x2c] sm:$0xf]
    %v359 = vld [vmem:[#allocation4 + $0x30] sm:$0xff]
    %v360 = vld [vmem:[#allocation4 + $0x38] sm:$0xf]
    %v361 = vld [vmem:[#allocation4 + $0x3c] sm:$0xff]
    %v362 = vld [vmem:[#allocation4 + $0x44] sm:$0xf]
    %v363 = vld [vmem:[#allocation4 + $0x48] sm:$0xff]
    %v364 = vld [vmem:[#allocation4 + $0x50] sm:$0xf]
    %v365 = vld [vmem:[#allocation4 + $0x54] sm:$0xff]
    %v366 = vld [vmem:[#allocation4 + $0x5c] sm:$0xf]
    %v367 = vld [vmem:[#allocation4 + $0x60] sm:$0xff]
    %v368 = vld [vmem:[#allocation4 + $0x68] sm:$0xf]
    %v369 = vld [vmem:[#allocation4 + $0x6c] sm:$0xff]
    %v370 = vld [vmem:[#allocation4 + $0x74] sm:$0xf]
    %v371 = vld [vmem:[#allocation4 + $0x78] sm:$0xff]
    %v372 = vld [vmem:[#allocation4 + $0x80] sm:$0xf]
    %v373 = vld [vmem:[#allocation4 + $0x84] sm:$0xff]
    %v374 = vld [vmem:[#allocation4 + $0x8c] sm:$0xf]
    %v375 = vld [vmem:[#allocation4 + $0x90] sm:$0xff]
    %v376 = vld [vmem:[#allocation4 + $0x98] sm:$0xf]
    %v377 = vld [vmem:[#allocation4 + $0x9c] sm:$0xff]
    %v378 = vld [vmem:[#allocation4 + $0xa4] sm:$0xf]
    %v379 = vld [vmem:[#allocation4 + $0xa8] sm:$0xff]
    %v380 = vld [vmem:[#allocation4 + $0xb0] sm:$0xf]
    %v381 = vld [vmem:[#allocation4 + $0xb4] sm:$0xff]
    %v382 = vld [vmem:[#allocation4 + $0xbc] sm:$0xf]
    %v383 = vld [vmem:[#allocation4 + $0xc0] sm:$0xff]
    %v384 = vld [vmem:[#allocation4 + $0xc8] sm:$0xf]
    %v385 = vld [vmem:[#allocation4 + $0xcc] sm:$0xff]
    %v386 = vld [vmem:[#allocation4 + $0xd4] sm:$0xf]
    %v387 = vld [vmem:[#allocation4 + $0xd8] sm:$0xff]
    %v388 = vld [vmem:[#allocation4 + $0xe0] sm:$0xf]
    %v389 = vld [vmem:[#allocation4 + $0xe4] sm:$0xff]
    %v390 = vld [vmem:[#allocation4 + $0xec] sm:$0xf]
    %v391 = vld [vmem:[#allocation4 + $0xf0] sm:$0xff]
    %v392 = vld [vmem:[#allocation4 + $0xf8] sm:$0xf]
    %v393 = vld [vmem:[#allocation4 + $0xfc] sm:$0xff]
    %v394 = vld [vmem:[#allocation4 + $0x104] sm:$0xf]
    %v395 = vld [vmem:[#allocation4 + $0x108] sm:$0xff]
    %v396 = vld [vmem:[#allocation4 + $0x110] sm:$0xf]
    %v397 = vld [vmem:[#allocation4 + $0x114] sm:$0xff]
    %v398 = vld [vmem:[#allocation4 + $0x11c] sm:$0xf]
    %v399 = vld [vmem:[#allocation4 + $0x120] sm:$0xff]
    %v400 = vld [vmem:[#allocation4 + $0x128] sm:$0xf]
    %v401 = vld [vmem:[#allocation4 + $0x12c] sm:$0xff]
    %v402 = vld [vmem:[#allocation4 + $0x134] sm:$0xf]
    %v403 = vld [vmem:[#allocation4 + $0x138] sm:$0xff]
    %v404 = vld [vmem:[#allocation4 + $0x140] sm:$0xf]
    %v405 = vld [vmem:[#allocation4 + $0x144] sm:$0xff]
    %v406 = vld [vmem:[#allocation4 + $0x14c] sm:$0xf]
    %v407 = vld [vmem:[#allocation4 + $0x150] sm:$0xff]
    %v408 = vld [vmem:[#allocation4 + $0x158] sm:$0xf]
    %v409 = vld [vmem:[#allocation4 + $0x15c] sm:$0xff]
    %v410 = vld [vmem:[#allocation4 + $0x164] sm:$0xf]
    %v411 = vld [vmem:[#allocation4 + $0x168] sm:$0xff]
    %v412 = vld [vmem:[#allocation4 + $0x170] sm:$0xf]
    %v413 = vld [vmem:[#allocation4 + $0x174] sm:$0xff]
    %v414 = vld [vmem:[#allocation4 + $0x17c] sm:$0xf]
    %v415 = vld [vmem:[#allocation4 + $0x180] sm:$0xff]
    %v416 = vld [vmem:[#allocation4 + $0x188] sm:$0xf]
    %v417 = vld [vmem:[#allocation4 + $0x18c] sm:$0xff]
    %v418 = vld [vmem:[#allocation4 + $0x194] sm:$0xf]
    %v419 = vld [vmem:[#allocation4 + $0x198] sm:$0xff]
    %v420 = vld [vmem:[#allocation4 + $0x1a0] sm:$0xf]
    %v421 = vld [vmem:[#allocation4 + $0x1a4] sm:$0xff]
    %v422 = vld [vmem:[#allocation4 + $0x1ac] sm:$0xf]
    %v423 = vld [vmem:[#allocation4 + $0x1b0] sm:$0xff]
    %v424 = vld [vmem:[#allocation4 + $0x1b8] sm:$0xf]
    %v425 = vld [vmem:[#allocation4 + $0x1bc] sm:$0xff]
    %v426 = vld [vmem:[#allocation4 + $0x1c4] sm:$0xf]
    %v427 = vld [vmem:[#allocation4 + $0x1c8] sm:$0xff]
    %v428 = vld [vmem:[#allocation4 + $0x1d0] sm:$0xf]
    %v429 = vld [vmem:[#allocation4 + $0x1d4] sm:$0xff]
    %v430 = vld [vmem:[#allocation4 + $0x1dc] sm:$0xf]
    %v431 = vld [vmem:[#allocation4 + $0x1e0] sm:$0xff]
    %v432 = vld [vmem:[#allocation4 + $0x1e8] sm:$0xf]
    %v433 = vld [vmem:[#allocation4 + $0x1ec] sm:$0xff]
    %v434 = vld [vmem:[#allocation4 + $0x1f4] sm:$0xf]
    %v435 = vld [vmem:[#allocation4 + $0x1f8] sm:$0xff]
    %v436 = vld [vmem:[#allocation4 + $0x200] sm:$0xf]
    %v437 = vld [vmem:[#allocation4 + $0x204] sm:$0xff]
    %v438 = vld [vmem:[#allocation4 + $0x20c] sm:$0xf]
    %v439 = vld [vmem:[#allocation4 + $0x210] sm:$0xff]
    %v440 = vld [vmem:[#allocation4 + $0x218] sm:$0xf]
    %v441 = vld [vmem:[#allocation4 + $0x21c] sm:$0xff]
    %v442 = vld [vmem:[#allocation4 + $0x224] sm:$0xf]
    %v443 = vld [vmem:[#allocation4 + $0x228] sm:$0xff]
    %v444 = vld [vmem:[#allocation4 + $0x230] sm:$0xf]
    %v445 = vld [vmem:[#allocation4 + $0x234] sm:$0xff]
    %v446 = vld [vmem:[#allocation4 + $0x23c] sm:$0xf]
    %v447 = vld [vmem:[#allocation4 + $0x240] sm:$0xff]
    %v448 = vld [vmem:[#allocation4 + $0x248] sm:$0xf]
    %v449 = vld [vmem:[#allocation4 + $0x24c] sm:$0xff]
    %v450 = vld [vmem:[#allocation4 + $0x254] sm:$0xf]
    %v451 = vld [vmem:[#allocation4 + $0x258] sm:$0xff]
    %v452 = vld [vmem:[#allocation4 + $0x260] sm:$0xf]
    %v453 = vld [vmem:[#allocation4 + $0x264] sm:$0xff]
    %v454 = vld [vmem:[#allocation4 + $0x26c] sm:$0xf]
    %v455 = vld [vmem:[#allocation4 + $0x270] sm:$0xff]
    %v456 = vld [vmem:[#allocation4 + $0x278] sm:$0xf]
    %v457 = vld [vmem:[#allocation4 + $0x27c] sm:$0xff]
    %v458 = vld [vmem:[#allocation4 + $0x284] sm:$0xf]
    %v459 = vld [vmem:[#allocation4 + $0x288] sm:$0xff]
    %v460 = vld [vmem:[#allocation4 + $0x290] sm:$0xf]
    %v461 = vld [vmem:[#allocation4 + $0x294] sm:$0xff]
    %v462 = vld [vmem:[#allocation4 + $0x29c] sm:$0xf]
    %v463 = vld [vmem:[#allocation4 + $0x2a0] sm:$0xff]
    %v464 = vld [vmem:[#allocation4 + $0x2a8] sm:$0xf]
    %v465 = vld [vmem:[#allocation4 + $0x2ac] sm:$0xff]
    %v466 = vld [vmem:[#allocation4 + $0x2b4] sm:$0xf]
    %v467 = vld [vmem:[#allocation4 + $0x2b8] sm:$0xff]
    %v468 = vld [vmem:[#allocation4 + $0x2c0] sm:$0xf]
    %v469 = vld [vmem:[#allocation4 + $0x2c4] sm:$0xff]
    %v470 = vld [vmem:[#allocation4 + $0x2cc] sm:$0xf]
    %v471 = vld [vmem:[#allocation4 + $0x2d0] sm:$0xff]
    %v472 = vld [vmem:[#allocation4 + $0x2d8] sm:$0xf]
    %v473 = vld [vmem:[#allocation4 + $0x2dc] sm:$0xff]
    %v474 = vld [vmem:[#allocation4 + $0x2e4] sm:$0xf]
    %v475 = vld [vmem:[#allocation4 + $0x2e8] sm:$0xff]
    %v476 = vld [vmem:[#allocation4 + $0x2f0] sm:$0xf]
    %v477 = vld [vmem:[#allocation4 + $0x2f4] sm:$0xff]
    %v478 = vld [vmem:[#allocation4 + $0x2fc] sm:$0xf]
    %v479 = vld [vmem:[%s4] sm:$0x7]
    %v481 = vperm.slane %v479, 0
    %v482 = vperm.slane %v479, 1
    %v483 = vperm.slane %v479, 2
    %v615 = vunpack.c.l.b16 %v351
    %v616 = vunpack.c.h.b16 %v351
    %v617 = vunpack.c.l.b16 %v352
    %v618 = vunpack.c.l.b16 %v353
    %v619 = vunpack.c.h.b16 %v353
    %v620 = vunpack.c.l.b16 %v354
    %v621 = vunpack.c.l.b16 %v355
    %v622 = vunpack.c.h.b16 %v355
    %v623 = vunpack.c.l.b16 %v356
    %v624 = vunpack.c.l.b16 %v357
    %v625 = vunpack.c.h.b16 %v357
    %v626 = vunpack.c.l.b16 %v358
    %v627 = vunpack.c.l.b16 %v359
    %v628 = vunpack.c.h.b16 %v359
    %v629 = vunpack.c.l.b16 %v360
    %v630 = vunpack.c.l.b16 %v361
    %v631 = vunpack.c.h.b16 %v361
    %v632 = vunpack.c.l.b16 %v362
    %v633 = vunpack.c.l.b16 %v363
    %v634 = vunpack.c.h.b16 %v363
    %v635 = vunpack.c.l.b16 %v364
    %v636 = vunpack.c.l.b16 %v365
    %v637 = vunpack.c.h.b16 %v365
    %v638 = vunpack.c.l.b16 %v366
    %v639 = vunpack.c.l.b16 %v367
    %v640 = vunpack.c.h.b16 %v367
    %v641 = vunpack.c.l.b16 %v368
    %v642 = vunpack.c.l.b16 %v369
    %v643 = vunpack.c.h.b16 %v369
    %v644 = vunpack.c.l.b16 %v370
    %v645 = vunpack.c.l.b16 %v371
    %v646 = vunpack.c.h.b16 %v371
    %v647 = vunpack.c.l.b16 %v372
    %v648 = vunpack.c.l.b16 %v373
    %v649 = vunpack.c.h.b16 %v373
    %v650 = vunpack.c.l.b16 %v374
    %v651 = vunpack.c.l.b16 %v375
    %v652 = vunpack.c.h.b16 %v375
    %v653 = vunpack.c.l.b16 %v376
    %v654 = vunpack.c.l.b16 %v377
    %v655 = vunpack.c.h.b16 %v377
    %v656 = vunpack.c.l.b16 %v378
    %v657 = vunpack.c.l.b16 %v379
    %v658 = vunpack.c.h.b16 %v379
    %v659 = vunpack.c.l.b16 %v380
    %v660 = vunpack.c.l.b16 %v381
    %v661 = vunpack.c.h.b16 %v381
    %v662 = vunpack.c.l.b16 %v382
    %v663 = vunpack.c.l.b16 %v383
    %v664 = vunpack.c.h.b16 %v383
    %v665 = vunpack.c.l.b16 %v384
    %v666 = vunpack.c.l.b16 %v385
    %v667 = vunpack.c.h.b16 %v385
    %v668 = vunpack.c.l.b16 %v386
    %v669 = vunpack.c.l.b16 %v387
    %v670 = vunpack.c.h.b16 %v387
    %v671 = vunpack.c.l.b16 %v388
    %v672 = vunpack.c.l.b16 %v389
    %v673 = vunpack.c.h.b16 %v389
    %v674 = vunpack.c.l.b16 %v390
    %v675 = vunpack.c.l.b16 %v391
    %v676 = vunpack.c.h.b16 %v391
    %v677 = vunpack.c.l.b16 %v392
    %v678 = vunpack.c.l.b16 %v393
    %v679 = vunpack.c.h.b16 %v393
    %v680 = vunpack.c.l.b16 %v394
    %v681 = vunpack.c.l.b16 %v395
    %v682 = vunpack.c.h.b16 %v395
    %v683 = vunpack.c.l.b16 %v396
    %v684 = vunpack.c.l.b16 %v397
    %v685 = vunpack.c.h.b16 %v397
    %v686 = vunpack.c.l.b16 %v398
    %v687 = vunpack.c.l.b16 %v399
    %v688 = vunpack.c.h.b16 %v399
    %v689 = vunpack.c.l.b16 %v400
    %v690 = vunpack.c.l.b16 %v401
    %v691 = vunpack.c.h.b16 %v401
    %v692 = vunpack.c.l.b16 %v402
    %v693 = vunpack.c.l.b16 %v403
    %v694 = vunpack.c.h.b16 %v403
    %v695 = vunpack.c.l.b16 %v404
    %v696 = vunpack.c.l.b16 %v405
    %v697 = vunpack.c.h.b16 %v405
    %v698 = vunpack.c.l.b16 %v406
    %v699 = vunpack.c.l.b16 %v407
    %v700 = vunpack.c.h.b16 %v407
    %v701 = vunpack.c.l.b16 %v408
    %v702 = vunpack.c.l.b16 %v409
    %v703 = vunpack.c.h.b16 %v409
    %v704 = vunpack.c.l.b16 %v410
    %v705 = vunpack.c.l.b16 %v411
    %v706 = vunpack.c.h.b16 %v411
    %v707 = vunpack.c.l.b16 %v412
    %v708 = vunpack.c.l.b16 %v413
    %v709 = vunpack.c.h.b16 %v413
    %v710 = vunpack.c.l.b16 %v414
    %v711 = vunpack.c.l.b16 %v415
    %v712 = vunpack.c.h.b16 %v415
    %v713 = vunpack.c.l.b16 %v416
    %v714 = vunpack.c.l.b16 %v417
    %v715 = vunpack.c.h.b16 %v417
    %v716 = vunpack.c.l.b16 %v418
    %v717 = vunpack.c.l.b16 %v419
    %v718 = vunpack.c.h.b16 %v419
    %v719 = vunpack.c.l.b16 %v420
    %v720 = vunpack.c.l.b16 %v421
    %v721 = vunpack.c.h.b16 %v421
    %v722 = vunpack.c.l.b16 %v422
    %v723 = vunpack.c.l.b16 %v423
    %v724 = vunpack.c.h.b16 %v423
    %v725 = vunpack.c.l.b16 %v424
    %v726 = vunpack.c.l.b16 %v425
    %v727 = vunpack.c.h.b16 %v425
    %v728 = vunpack.c.l.b16 %v426
    %v729 = vunpack.c.l.b16 %v427
    %v730 = vunpack.c.h.b16 %v427
    %v731 = vunpack.c.l.b16 %v428
    %v732 = vunpack.c.l.b16 %v429
    %v733 = vunpack.c.h.b16 %v429
    %v734 = vunpack.c.l.b16 %v430
    %v735 = vunpack.c.l.b16 %v431
    %v736 = vunpack.c.h.b16 %v431
    %v737 = vunpack.c.l.b16 %v432
    %v738 = vunpack.c.l.b16 %v433
    %v739 = vunpack.c.h.b16 %v433
    %v740 = vunpack.c.l.b16 %v434
    %v741 = vunpack.c.l.b16 %v435
    %v742 = vunpack.c.h.b16 %v435
    %v743 = vunpack.c.l.b16 %v436
    %v744 = vunpack.c.l.b16 %v437
    %v745 = vunpack.c.h.b16 %v437
    %v746 = vunpack.c.l.b16 %v438
    %v747 = vunpack.c.l.b16 %v439
    %v748 = vunpack.c.h.b16 %v439
    %v749 = vunpack.c.l.b16 %v440
    %v750 = vunpack.c.l.b16 %v441
    %v751 = vunpack.c.h.b16 %v441
    %v752 = vunpack.c.l.b16 %v442
    %v753 = vunpack.c.l.b16 %v443
    %v754 = vunpack.c.h.b16 %v443
    %v755 = vunpack.c.l.b16 %v444
    %v756 = vunpack.c.l.b16 %v445
    %v757 = vunpack.c.h.b16 %v445
    %v758 = vunpack.c.l.b16 %v446
    %v759 = vunpack.c.l.b16 %v447
    %v760 = vunpack.c.h.b16 %v447
    %v761 = vunpack.c.l.b16 %v448
    %v762 = vunpack.c.l.b16 %v449
    %v763 = vunpack.c.h.b16 %v449
    %v764 = vunpack.c.l.b16 %v450
    %v765 = vunpack.c.l.b16 %v451
    %v766 = vunpack.c.h.b16 %v451
    %v767 = vunpack.c.l.b16 %v452
    %v768 = vunpack.c.l.b16 %v453
    %v769 = vunpack.c.h.b16 %v453
    %v770 = vunpack.c.l.b16 %v454
    %v771 = vunpack.c.l.b16 %v455
    %v772 = vunpack.c.h.b16 %v455
    %v773 = vunpack.c.l.b16 %v456
    %v774 = vunpack.c.l.b16 %v457
    %v775 = vunpack.c.h.b16 %v457
    %v776 = vunpack.c.l.b16 %v458
    %v777 = vunpack.c.l.b16 %v459
    %v778 = vunpack.c.h.b16 %v459
    %v779 = vunpack.c.l.b16 %v460
    %v780 = vunpack.c.l.b16 %v461
    %v781 = vunpack.c.h.b16 %v461
    %v782 = vunpack.c.l.b16 %v462
    %v783 = vunpack.c.l.b16 %v463
    %v784 = vunpack.c.h.b16 %v463
    %v785 = vunpack.c.l.b16 %v464
    %v786 = vunpack.c.l.b16 %v465
    %v787 = vunpack.c.h.b16 %v465
    %v788 = vunpack.c.l.b16 %v466
    %v789 = vunpack.c.l.b16 %v467
    %v790 = vunpack.c.h.b16 %v467
    %v791 = vunpack.c.l.b16 %v468
    %v792 = vunpack.c.l.b16 %v469
    %v793 = vunpack.c.h.b16 %v469
    %v794 = vunpack.c.l.b16 %v470
    %v795 = vunpack.c.l.b16 %v471
    %v796 = vunpack.c.h.b16 %v471
    %v797 = vunpack.c.l.b16 %v472
    %v798 = vunpack.c.l.b16 %v473
    %v799 = vunpack.c.h.b16 %v473
    %v800 = vunpack.c.l.b16 %v474
    %v801 = vunpack.c.l.b16 %v475
    %v802 = vunpack.c.h.b16 %v475
    %v803 = vunpack.c.l.b16 %v476
    %v804 = vunpack.c.l.b16 %v477
    %v805 = vunpack.c.h.b16 %v477
    %v806 = vunpack.c.l.b16 %v478
    %v807 = vpack.c.b16 %v618, %v615
    %v808 = vpack.c.b16 %v619, %v616
    %v809 = vpack.c.b16 %v620, %v617
    %v810 = vpack.c.b16 %v624, %v621
    %v811 = vpack.c.b16 %v625, %v622
    %v812 = vpack.c.b16 %v626, %v623
    %v813 = vpack.c.b16 %v630, %v627
    %v814 = vpack.c.b16 %v631, %v628
    %v815 = vpack.c.b16 %v632, %v629
    %v816 = vpack.c.b16 %v636, %v633
    %v817 = vpack.c.b16 %v637, %v634
    %v818 = vpack.c.b16 %v638, %v635
    %v819 = vpack.c.b16 %v642, %v639
    %v820 = vpack.c.b16 %v643, %v640
    %v821 = vpack.c.b16 %v644, %v641
    %v822 = vpack.c.b16 %v648, %v645
    %v823 = vpack.c.b16 %v649, %v646
    %v824 = vpack.c.b16 %v650, %v647
    %v825 = vpack.c.b16 %v654, %v651
    %v826 = vpack.c.b16 %v655, %v652
    %v827 = vpack.c.b16 %v656, %v653
    %v828 = vpack.c.b16 %v660, %v657
    %v829 = vpack.c.b16 %v661, %v658
    %v830 = vpack.c.b16 %v662, %v659
    %v831 = vpack.c.b16 %v666, %v663
    %v832 = vpack.c.b16 %v667, %v664
    %v833 = vpack.c.b16 %v668, %v665
    %v834 = vpack.c.b16 %v672, %v669
    %v835 = vpack.c.b16 %v673, %v670
    %v836 = vpack.c.b16 %v674, %v671
    %v837 = vpack.c.b16 %v678, %v675
    %v838 = vpack.c.b16 %v679, %v676
    %v839 = vpack.c.b16 %v680, %v677
    %v840 = vpack.c.b16 %v684, %v681
    %v841 = vpack.c.b16 %v685, %v682
    %v842 = vpack.c.b16 %v686, %v683
    %v843 = vpack.c.b16 %v690, %v687
    %v844 = vpack.c.b16 %v691, %v688
    %v845 = vpack.c.b16 %v692, %v689
    %v846 = vpack.c.b16 %v696, %v693
    %v847 = vpack.c.b16 %v697, %v694
    %v848 = vpack.c.b16 %v698, %v695
    %v849 = vpack.c.b16 %v702, %v699
    %v850 = vpack.c.b16 %v703, %v700
    %v851 = vpack.c.b16 %v704, %v701
    %v852 = vpack.c.b16 %v708, %v705
    %v853 = vpack.c.b16 %v709, %v706
    %v854 = vpack.c.b16 %v710, %v707
    %v855 = vpack.c.b16 %v714, %v711
    %v856 = vpack.c.b16 %v715, %v712
    %v857 = vpack.c.b16 %v716, %v713
    %v858 = vpack.c.b16 %v720, %v717
    %v859 = vpack.c.b16 %v721, %v718
    %v860 = vpack.c.b16 %v722, %v719
    %v861 = vpack.c.b16 %v726, %v723
    %v862 = vpack.c.b16 %v727, %v724
    %v863 = vpack.c.b16 %v728, %v725
    %v864 = vpack.c.b16 %v732, %v729
    %v865 = vpack.c.b16 %v733, %v730
    %v866 = vpack.c.b16 %v734, %v731
    %v867 = vpack.c.b16 %v738, %v735
    %v868 = vpack.c.b16 %v739, %v736
    %v869 = vpack.c.b16 %v740, %v737
    %v870 = vpack.c.b16 %v744, %v741
    %v871 = vpack.c.b16 %v745, %v742
    %v872 = vpack.c.b16 %v746, %v743
    %v873 = vpack.c.b16 %v750, %v747
    %v874 = vpack.c.b16 %v751, %v748
    %v875 = vpack.c.b16 %v752, %v749
    %v876 = vpack.c.b16 %v756, %v753
    %v877 = vpack.c.b16 %v757, %v754
    %v878 = vpack.c.b16 %v758, %v755
    %v879 = vpack.c.b16 %v762, %v759
    %v880 = vpack.c.b16 %v763, %v760
    %v881 = vpack.c.b16 %v764, %v761
    %v882 = vpack.c.b16 %v768, %v765
    %v883 = vpack.c.b16 %v769, %v766
    %v884 = vpack.c.b16 %v770, %v767
    %v885 = vpack.c.b16 %v774, %v771
    %v886 = vpack.c.b16 %v775, %v772
    %v887 = vpack.c.b16 %v776, %v773
    %v888 = vpack.c.b16 %v780, %v777
    %v889 = vpack.c.b16 %v781, %v778
    %v890 = vpack.c.b16 %v782, %v779
    %v891 = vpack.c.b16 %v786, %v783
    %v892 = vpack.c.b16 %v787, %v784
    %v893 = vpack.c.b16 %v788, %v785
    %v894 = vpack.c.b16 %v792, %v789
    %v895 = vpack.c.b16 %v793, %v790
    %v896 = vpack.c.b16 %v794, %v791
    %v897 = vpack.c.b16 %v798, %v795
    %v898 = vpack.c.b16 %v799, %v796
    %v899 = vpack.c.b16 %v800, %v797
    %v900 = vpack.c.b16 %v804, %v801
    %v901 = vpack.c.b16 %v805, %v802
    %v902 = vpack.c.b16 %v806, %v803
    %999 = vmatpush.bf16.msra.mxu0 %v828
    %1000 = vmatpush.bf16.msra.mxu0 %v825
    %1001 = vmatpush.bf16.msra.mxu0 %v822
    %1002 = vmatpush.bf16.msra.mxu0 %v819
    %1003 = vmatpush.bf16.msra.mxu0 %v816
    %1004 = vmatpush.bf16.msra.mxu0 %v813
    %1005 = vmatpush.bf16.msra.mxu0 %v810
    %1006 = vmatpush.bf16.msra.mxu0 %v807
    %1007 = vmatmul.bf16.gmra.mxu0 %v347
    %v1008 = vpop.f32.mrf.mxu0
    %v1009 = vadd.f32 %v481, %v1008
    %v1010 = vpop.f32.mrf.mxu0
    %v1011 = vadd.f32 %v481, %v1010
    %1012 = vdwg.mxu0
    %1013 = vmatpush.bf16.msra.mxu0 %v852
    %1014 = vmatpush.bf16.msra.mxu0 %v849
    %1015 = vmatpush.bf16.msra.mxu0 %v846
    %1016 = vmatpush.bf16.msra.mxu0 %v843
    %1017 = vmatpush.bf16.msra.mxu0 %v840
    %1018 = vmatpush.bf16.msra.mxu0 %v837
    %1019 = vmatpush.bf16.msra.mxu0 %v834
    %1020 = vmatpush.bf16.msra.mxu0 %v831
    %1021 = vmatmul.bf16.gmra.mxu0 %v348
    %v1022 = vpop.f32.mrf.mxu0
    %v1023 = vadd.f32 %v1009, %v1022
    %v1024 = vpop.f32.mrf.mxu0
    %v1025 = vadd.f32 %v1011, %v1024
    %1026 = vdwg.mxu0
    %1027 = vmatpush.bf16.msra.mxu0 %v876
    %1028 = vmatpush.bf16.msra.mxu0 %v873
    %1029 = vmatpush.bf16.msra.mxu0 %v870
    %1030 = vmatpush.bf16.msra.mxu0 %v867
    %1031 = vmatpush.bf16.msra.mxu0 %v864
    %1032 = vmatpush.bf16.msra.mxu0 %v861
    %1033 = vmatpush.bf16.msra.mxu0 %v858
    %1034 = vmatpush.bf16.msra.mxu0 %v855
    %1035 = vmatmul.bf16.gmra.mxu0 %v349
    %v1036 = vpop.f32.mrf.mxu0
    %v1037 = vadd.f32 %v1023, %v1036
    %v1038 = vpop.f32.mrf.mxu0
    %v1039 = vadd.f32 %v1025, %v1038
    %1040 = vdwg.mxu0
    %1041 = vmatpush.bf16.msra.mxu0 %v900
    %1042 = vmatpush.bf16.msra.mxu0 %v897
    %1043 = vmatpush.bf16.msra.mxu0 %v894
    %1044 = vmatpush.bf16.msra.mxu0 %v891
    %1045 = vmatpush.bf16.msra.mxu0 %v888
    %1046 = vmatpush.bf16.msra.mxu0 %v885
    %1047 = vmatpush.bf16.msra.mxu0 %v882
    %1048 = vmatpush.bf16.msra.mxu0 %v879
    %1049 = vmatmul.bf16.gmra.mxu0 %v350
    %v1050 = vpop.f32.mrf.mxu0
    %v1051 = vadd.f32 %v1037, %v1050
    %v1052 = vpop.f32.mrf.mxu0
    %v1053 = vadd.f32 %v1039, %v1052
    %1054 = vdwg.mxu0
    %1055 = vmatpush.bf16.msra.mxu0 %v829
    %1056 = vmatpush.bf16.msra.mxu0 %v826
    %1057 = vmatpush.bf16.msra.mxu0 %v823
    %1058 = vmatpush.bf16.msra.mxu0 %v820
    %1059 = vmatpush.bf16.msra.mxu0 %v817
    %1060 = vmatpush.bf16.msra.mxu0 %v814
    %1061 = vmatpush.bf16.msra.mxu0 %v811
    %1062 = vmatpush.bf16.msra.mxu0 %v808
    %1063 = vmatmul.bf16.gmra.mxu0 %v347
    %v1064 = vpop.f32.mrf.mxu0
    %v1065 = vadd.f32 %v482, %v1064
    %v1066 = vpop.f32.mrf.mxu0
    %v1067 = vadd.f32 %v482, %v1066
    %1068 = vdwg.mxu0
    %1069 = vmatpush.bf16.msra.mxu0 %v853
    %1070 = vmatpush.bf16.msra.mxu0 %v850
    %1071 = vmatpush.bf16.msra.mxu0 %v847
    %1072 = vmatpush.bf16.msra.mxu0 %v844
    %1073 = vmatpush.bf16.msra.mxu0 %v841
    %1074 = vmatpush.bf16.msra.mxu0 %v838
    %1075 = vmatpush.bf16.msra.mxu0 %v835
    %1076 = vmatpush.bf16.msra.mxu0 %v832
    %1077 = vmatmul.bf16.gmra.mxu0 %v348
    %v1078 = vpop.f32.mrf.mxu0
    %v1079 = vadd.f32 %v1065, %v1078
    %v1080 = vpop.f32.mrf.mxu0
    %v1081 = vadd.f32 %v1067, %v1080
    %1082 = vdwg.mxu0
    %1083 = vmatpush.bf16.msra.mxu0 %v877
    %1084 = vmatpush.bf16.msra.mxu0 %v874
    %1085 = vmatpush.bf16.msra.mxu0 %v871
    %1086 = vmatpush.bf16.msra.mxu0 %v868
    %1087 = vmatpush.bf16.msra.mxu0 %v865
    %1088 = vmatpush.bf16.msra.mxu0 %v862
    %1089 = vmatpush.bf16.msra.mxu0 %v859
    %1090 = vmatpush.bf16.msra.mxu0 %v856
    %1091 = vmatmul.bf16.gmra.mxu0 %v349
    %v1092 = vpop.f32.mrf.mxu0
    %v1093 = vadd.f32 %v1079, %v1092
    %v1094 = vpop.f32.mrf.mxu0
    %v1095 = vadd.f32 %v1081, %v1094
    %1096 = vdwg.mxu0
    %1097 = vmatpush.bf16.msra.mxu0 %v901
    %1098 = vmatpush.bf16.msra.mxu0 %v898
    %1099 = vmatpush.bf16.msra.mxu0 %v895
    %1100 = vmatpush.bf16.msra.mxu0 %v892
    %1101 = vmatpush.bf16.msra.mxu0 %v889
    %1102 = vmatpush.bf16.msra.mxu0 %v886
    %1103 = vmatpush.bf16.msra.mxu0 %v883
    %1104 = vmatpush.bf16.msra.mxu0 %v880
    %1105 = vmatmul.bf16.gmra.mxu0 %v350
    %v1106 = vpop.f32.mrf.mxu0
    %v1107 = vadd.f32 %v1093, %v1106
    %v1108 = vpop.f32.mrf.mxu0
    %v1109 = vadd.f32 %v1095, %v1108
    %1110 = vdwg.mxu0
    %1111 = vmatpush.bf16.msra.mxu0 %v830
    %1112 = vmatpush.bf16.msra.mxu0 %v827
    %1113 = vmatpush.bf16.msra.mxu0 %v824
    %1114 = vmatpush.bf16.msra.mxu0 %v821
    %1115 = vmatpush.bf16.msra.mxu0 %v818
    %1116 = vmatpush.bf16.msra.mxu0 %v815
    %1117 = vmatpush.bf16.msra.mxu0 %v812
    %1118 = vmatpush.bf16.msra.mxu0 %v809
    %1119 = vmatmul.bf16.gmra.mxu0 %v347
    %v1120 = vpop.f32.mrf.mxu0
    %v1121 = vadd.f32 %v483, %v1120
    %v1122 = vpop.f32.mrf.mxu0
    %v1123 = vadd.f32 %v483, %v1122
    %1124 = vdwg.mxu0
    %1125 = vmatpush.bf16.msra.mxu0 %v854
    %1126 = vmatpush.bf16.msra.mxu0 %v851
    %1127 = vmatpush.bf16.msra.mxu0 %v848
    %1128 = vmatpush.bf16.msra.mxu0 %v845
    %1129 = vmatpush.bf16.msra.mxu0 %v842
    %1130 = vmatpush.bf16.msra.mxu0 %v839
    %1131 = vmatpush.bf16.msra.mxu0 %v836
    %1132 = vmatpush.bf16.msra.mxu0 %v833
    %1133 = vmatmul.bf16.gmra.mxu0 %v348
    %v1134 = vpop.f32.mrf.mxu0
    %v1135 = vadd.f32 %v1121, %v1134
    %v1136 = vpop.f32.mrf.mxu0
    %v1137 = vadd.f32 %v1123, %v1136
    %1138 = vdwg.mxu0
    %1139 = vmatpush.bf16.msra.mxu0 %v878
    %1140 = vmatpush.bf16.msra.mxu0 %v875
    %1141 = vmatpush.bf16.msra.mxu0 %v872
    %1142 = vmatpush.bf16.msra.mxu0 %v869
    %1143 = vmatpush.bf16.msra.mxu0 %v866
    %1144 = vmatpush.bf16.msra.mxu0 %v863
    %1145 = vmatpush.bf16.msra.mxu0 %v860
    %1146 = vmatpush.bf16.msra.mxu0 %v857
    %1147 = vmatmul.bf16.gmra.mxu0 %v349
    %v1148 = vpop.f32.mrf.mxu0
    %v1149 = vadd.f32 %v1135, %v1148
    %v1150 = vpop.f32.mrf.mxu0
    %v1151 = vadd.f32 %v1137, %v1150
    %1152 = vdwg.mxu0
    %1153 = vmatpush.bf16.msra.mxu0 %v902
    %1154 = vmatpush.bf16.msra.mxu0 %v899
    %1155 = vmatpush.bf16.msra.mxu0 %v896
    %1156 = vmatpush.bf16.msra.mxu0 %v893
    %1157 = vmatpush.bf16.msra.mxu0 %v890
    %1158 = vmatpush.bf16.msra.mxu0 %v887
    %1159 = vmatpush.bf16.msra.mxu0 %v884
    %1160 = vmatpush.bf16.msra.mxu0 %v881
    %1161 = vmatmul.bf16.gmra.mxu0 %v350
    %v1162 = vpop.f32.mrf.mxu0
    %v1163 = vadd.f32 %v1149, %v1162
    %v1164 = vpop.f32.mrf.mxu0
    %v1165 = vadd.f32 %v1151, %v1164
    %1166 = vdwg.mxu0
    %v1167 = vmax.f32 %v1051, 0.0
    %v1168 = vmax.f32 %v1107, 0.0
    %v1169 = vmax.f32 %v1163, 0.0
    %v1170 = vmax.f32 %v1053, 0.0
    %v1171 = vmax.f32 %v1109, 0.0
    %v1172 = vmax.f32 %v1165, 0.0
    %v1173 = vpack.c.bf16 %v1170, %v1167
    %v1174 = vpack.c.bf16 %v1171, %v1168
    %v1175 = vpack.c.bf16 %v1172, %v1169
    %v1176 = vld [vmem:[#allocation6] sm:$0xf]
    %v1177 = vld [vmem:[#allocation6 + $0x4] sm:$0xf]
    %v1178 = vld [vmem:[#allocation6 + $0x8] sm:$0xf]
    %v1179 = vld [vmem:[#allocation6 + $0xc] sm:$0xf]
    %v1180 = vld [vmem:[#allocation6 + $0x10] sm:$0xf]
    %v1181 = vld [vmem:[#allocation6 + $0x14] sm:$0xf]
    %v1182 = vld [vmem:[#allocation6 + $0x18] sm:$0xf]
    %v1183 = vld [vmem:[#allocation6 + $0x1c] sm:$0xf]
    %v1184 = vld [vmem:[#allocation6 + $0x20] sm:$0xf]
    %v1185 = vld [vmem:[#allocation6 + $0x24] sm:$0xf]
    %v1186 = vld [vmem:[#allocation6 + $0x28] sm:$0xf]
    %v1187 = vld [vmem:[#allocation6 + $0x2c] sm:$0xf]
    %v1188 = vld [vmem:[#allocation6 + $0x30] sm:$0xf]
    %v1189 = vld [vmem:[#allocation6 + $0x34] sm:$0xf]
    %v1190 = vld [vmem:[#allocation6 + $0x38] sm:$0xf]
    %v1191 = vld [vmem:[#allocation6 + $0x3c] sm:$0xf]
    %v1192 = vld [vmem:[#allocation6 + $0x40] sm:$0xf]
    %v1193 = vld [vmem:[#allocation6 + $0x44] sm:$0xf]
    %v1194 = vld [vmem:[#allocation6 + $0x48] sm:$0xf]
    %v1195 = vld [vmem:[#allocation6 + $0x4c] sm:$0xf]
    %v1196 = vld [vmem:[#allocation6 + $0x50] sm:$0xf]
    %v1197 = vld [vmem:[#allocation6 + $0x54] sm:$0xf]
    %v1198 = vld [vmem:[#allocation6 + $0x58] sm:$0xf]
    %v1199 = vld [vmem:[#allocation6 + $0x5c] sm:$0xf]
    %v1200 = vld [vmem:[#allocation6 + $0x60] sm:$0xf]
    %v1201 = vld [vmem:[#allocation6 + $0x64] sm:$0xf]
    %v1202 = vld [vmem:[#allocation6 + $0x68] sm:$0xf]
    %v1203 = vld [vmem:[#allocation6 + $0x6c] sm:$0xf]
    %v1204 = vld [vmem:[#allocation6 + $0x70] sm:$0xf]
    %v1205 = vld [vmem:[#allocation6 + $0x74] sm:$0xf]
    %v1206 = vld [vmem:[#allocation6 + $0x78] sm:$0xf]
    %v1207 = vld [vmem:[#allocation6 + $0x7c] sm:$0xf]
    %v1208 = vld [vmem:[#allocation6 + $0x80] sm:$0xf]
    %v1209 = vld [vmem:[#allocation6 + $0x84] sm:$0xf]
    %v1210 = vld [vmem:[#allocation6 + $0x88] sm:$0xf]
    %v1211 = vld [vmem:[#allocation6 + $0x8c] sm:$0xf]
    %v1212 = vld [vmem:[#allocation6 + $0x90] sm:$0xf]
    %v1213 = vld [vmem:[#allocation6 + $0x94] sm:$0xf]
    %v1214 = vld [vmem:[#allocation6 + $0x98] sm:$0xf]
    %v1215 = vld [vmem:[#allocation6 + $0x9c] sm:$0xf]
    %v1216 = vld [vmem:[#allocation6 + $0xa0] sm:$0xf]
    %v1217 = vld [vmem:[#allocation6 + $0xa4] sm:$0xf]
    %v1218 = vld [vmem:[#allocation6 + $0xa8] sm:$0xf]
    %v1219 = vld [vmem:[#allocation6 + $0xac] sm:$0xf]
    %v1220 = vld [vmem:[#allocation6 + $0xb0] sm:$0xf]
    %v1221 = vld [vmem:[#allocation6 + $0xb4] sm:$0xf]
    %v1222 = vld [vmem:[#allocation6 + $0xb8] sm:$0xf]
    %v1223 = vld [vmem:[#allocation6 + $0xbc] sm:$0xf]
    %v1224 = vld [vmem:[%s6] sm:$0x1]
    %v1226 = vperm.slane %v1224, 0
    %v1276 = vunpack.c.l.b16 %v1176
    %v1277 = vunpack.c.l.b16 %v1177
    %v1278 = vunpack.c.l.b16 %v1178
    %v1279 = vunpack.c.l.b16 %v1179
    %v1280 = vunpack.c.l.b16 %v1180
    %v1281 = vunpack.c.l.b16 %v1181
    %v1282 = vunpack.c.l.b16 %v1182
    %v1283 = vunpack.c.l.b16 %v1183
    %v1284 = vunpack.c.l.b16 %v1184
    %v1285 = vunpack.c.l.b16 %v1185
    %v1286 = vunpack.c.l.b16 %v1186
    %v1287 = vunpack.c.l.b16 %v1187
    %v1288 = vunpack.c.l.b16 %v1188
    %v1289 = vunpack.c.l.b16 %v1189
    %v1290 = vunpack.c.l.b16 %v1190
    %v1291 = vunpack.c.l.b16 %v1191
    %v1292 = vunpack.c.l.b16 %v1192
    %v1293 = vunpack.c.l.b16 %v1193
    %v1294 = vunpack.c.l.b16 %v1194
    %v1295 = vunpack.c.l.b16 %v1195
    %v1296 = vunpack.c.l.b16 %v1196
    %v1297 = vunpack.c.l.b16 %v1197
    %v1298 = vunpack.c.l.b16 %v1198
    %v1299 = vunpack.c.l.b16 %v1199
    %v1300 = vunpack.c.l.b16 %v1200
    %v1301 = vunpack.c.l.b16 %v1201
    %v1302 = vunpack.c.l.b16 %v1202
    %v1303 = vunpack.c.l.b16 %v1203
    %v1304 = vunpack.c.l.b16 %v1204
    %v1305 = vunpack.c.l.b16 %v1205
    %v1306 = vunpack.c.l.b16 %v1206
    %v1307 = vunpack.c.l.b16 %v1207
    %v1308 = vunpack.c.l.b16 %v1208
    %v1309 = vunpack.c.l.b16 %v1209
    %v1310 = vunpack.c.l.b16 %v1210
    %v1311 = vunpack.c.l.b16 %v1211
    %v1312 = vunpack.c.l.b16 %v1212
    %v1313 = vunpack.c.l.b16 %v1213
    %v1314 = vunpack.c.l.b16 %v1214
    %v1315 = vunpack.c.l.b16 %v1215
    %v1316 = vunpack.c.l.b16 %v1216
    %v1317 = vunpack.c.l.b16 %v1217
    %v1318 = vunpack.c.l.b16 %v1218
    %v1319 = vunpack.c.l.b16 %v1219
    %v1320 = vunpack.c.l.b16 %v1220
    %v1321 = vunpack.c.l.b16 %v1221
    %v1322 = vunpack.c.l.b16 %v1222
    %v1323 = vunpack.c.l.b16 %v1223
    %v1324 = vpack.c.b16 %v1277, %v1276
    %v1325 = vpack.c.b16 %v1279, %v1278
    %v1326 = vpack.c.b16 %v1281, %v1280
    %v1327 = vpack.c.b16 %v1283, %v1282
    %v1328 = vpack.c.b16 %v1285, %v1284
    %v1329 = vpack.c.b16 %v1287, %v1286
    %v1330 = vpack.c.b16 %v1289, %v1288
    %v1331 = vpack.c.b16 %v1291, %v1290
    %v1332 = vpack.c.b16 %v1293, %v1292
    %v1333 = vpack.c.b16 %v1295, %v1294
    %v1334 = vpack.c.b16 %v1297, %v1296
    %v1335 = vpack.c.b16 %v1299, %v1298
    %v1336 = vpack.c.b16 %v1301, %v1300
    %v1337 = vpack.c.b16 %v1303, %v1302
    %v1338 = vpack.c.b16 %v1305, %v1304
    %v1339 = vpack.c.b16 %v1307, %v1306
    %v1340 = vpack.c.b16 %v1309, %v1308
    %v1341 = vpack.c.b16 %v1311, %v1310
    %v1342 = vpack.c.b16 %v1313, %v1312
    %v1343 = vpack.c.b16 %v1315, %v1314
    %v1344 = vpack.c.b16 %v1317, %v1316
    %v1345 = vpack.c.b16 %v1319, %v1318
    %v1346 = vpack.c.b16 %v1321, %v1320
    %v1347 = vpack.c.b16 %v1323, %v1322
    %1372 = vmatpush.bf16.msra.mxu0 %v1331
    %1373 = vmatpush.bf16.msra.mxu0 %v1330
    %1374 = vmatpush.bf16.msra.mxu0 %v1329
    %1375 = vmatpush.bf16.msra.mxu0 %v1328
    %1376 = vmatpush.bf16.msra.mxu0 %v1327
    %1377 = vmatpush.bf16.msra.mxu0 %v1326
    %1378 = vmatpush.bf16.msra.mxu0 %v1325
    %1379 = vmatpush.bf16.msra.mxu0 %v1324
    %1380 = vmatmul.bf16.gmra.mxu0 %v1173
    %v1381 = vpop.f32.mrf.mxu0
    %v1382 = vadd.f32 %v1226, %v1381
    %v1383 = vpop.f32.mrf.mxu0
    %v1384 = vadd.f32 %v1226, %v1383
    %1385 = vdwg.mxu0
    %1386 = vmatpush.bf16.msra.mxu0 %v1339
    %1387 = vmatpush.bf16.msra.mxu0 %v1338
    %1388 = vmatpush.bf16.msra.mxu0 %v1337
    %1389 = vmatpush.bf16.msra.mxu0 %v1336
    %1390 = vmatpush.bf16.msra.mxu0 %v1335
    %1391 = vmatpush.bf16.msra.mxu0 %v1334
    %1392 = vmatpush.bf16.msra.mxu0 %v1333
    %1393 = vmatpush.bf16.msra.mxu0 %v1332
    %1394 = vmatmul.bf16.gmra.mxu0 %v1174
    %v1395 = vpop.f32.mrf.mxu0
    %v1396 = vadd.f32 %v1382, %v1395
    %v1397 = vpop.f32.mrf.mxu0
    %v1398 = vadd.f32 %v1384, %v1397
    %1399 = vdwg.mxu0
    %1400 = vmatpush.bf16.msra.mxu0 %v1347
    %1401 = vmatpush.bf16.msra.mxu0 %v1346
    %1402 = vmatpush.bf16.msra.mxu0 %v1345
    %1403 = vmatpush.bf16.msra.mxu0 %v1344
    %1404 = vmatpush.bf16.msra.mxu0 %v1343
    %1405 = vmatpush.bf16.msra.mxu0 %v1342
    %1406 = vmatpush.bf16.msra.mxu0 %v1341
    %1407 = vmatpush.bf16.msra.mxu0 %v1340
    %1408 = vmatmul.bf16.gmra.mxu0 %v1175
    %v1409 = vpop.f32.mrf.mxu0
    %v1410 = vadd.f32 %v1396, %v1409
    %v1411 = vpop.f32.mrf.mxu0
    %v1412 = vadd.f32 %v1398, %v1411
    %1413 = vdwg.mxu0
    %v1414 = vtanh.pop %v1410
    %v1415 = vtanh.pop %v1412
    %1416 = vst [vmem:[%s7] sm:$0xff] %v1414
    %1417 = vst [vmem:[%s7 + $0x8] sm:$0xff] %v1415
    // Predicated region
    $region42: #{actor_forward.1} parent=1 // pred_check
      _
    $region43: #{actor_forward.1} parent=1 // pred_check_branch
      %1419 = sbr.rel (0) target = $region45
    $region44: #{actor_forward.1} parent=1 // pred_region
      _
    $region45: #{actor_forward.1} parent=1 // pred_fallthru
      _
    // Predicated region
    $region46: #{actor_forward.1} parent=1 // pred_check
      _
    $region47: #{actor_forward.1} parent=1 // pred_check_branch
      %1421 = sbr.rel (0) target = $region49
    $region48: #{actor_forward.1} parent=1 // pred_region
      _
    $region49: #{actor_forward.1} parent=1 // pred_fallthru
      _
    %1422 = vsyncpa [#allocation3], 1
    %1423 = vsyncpa [#allocation5], 1

</llo_original>
